<compile_context>
chip_gen: v5e
topology: v5e:2x2
jax: 0.10.0
libtpu: 0.0.40
codegen_flags: <defaults>
</compile_context>

<pallas_src>
import jax
import jax.numpy as jnp
from jax.experimental import pallas as pl
from jax.experimental.pallas import tpu as pltpu


def _round_up(a: int, m: int) -> int:
    return ((a + m - 1) // m) * m


def make_dqn_kernel(n_state: int, small_k: bool):
    def dqn_kernel(x_ref, w1_ref, b1_ref, w2_ref, b2_ref, w3_ref, b3_ref, out_ref):
        # ---- fc1 + ReLU ----
        if small_k:
            # K is tiny: rank-1 FMA chain on the VPU (f32), leave the MXU free.
            x = x_ref[...]            # (TB, n_state) f32
            w1 = w1_ref[...]          # (n_state, 128) f32
            h1 = b1_ref[...] + x[:, 0:1] * w1[0:1, :]
            for k in range(1, n_state):
                h1 = h1 + x[:, k : k + 1] * w1[k : k + 1, :]
        else:
            h1 = jnp.dot(x_ref[...], w1_ref[...], preferred_element_type=jnp.float32)
            h1 = h1 + b1_ref[...]
        h1 = jnp.maximum(h1, 0.0)     # f32 epilogue

        # ---- fc2 + ReLU ---- (bf16 in, f32 accumulate, f32 epilogue)
        h2 = jnp.dot(h1.astype(w2_ref.dtype), w2_ref[...],
                     preferred_element_type=jnp.float32)
        h2 = jnp.maximum(h2 + b2_ref[...], 0.0)

        # ---- fc3 (lane-dense padded to 128 outputs) ----
        h3 = jnp.dot(h2.astype(w3_ref.dtype), w3_ref[...],
                     preferred_element_type=jnp.float32)
        out_ref[...] = (h3 + b3_ref[...]).astype(out_ref.dtype)

    return dqn_kernel


def dqn_forward(x, params, *, tile_b: int = 512):
    """Forward pass. x: (B, n_state) f32.  Returns (B, n_actions) f32."""
    w1, b1, w2, b2, w3, b3 = params
    B, n_state = x.shape
    hidden = w1.shape[1]
    n_actions = w3.shape[1]

    # --- Pad fc3 to a lane-dense 128-wide output slab (zeros in the pad columns). ---
    n_out_p = _round_up(max(n_actions, 1), 128)
    w3p = jnp.zeros((hidden, n_out_p), jnp.float32).at[:, :n_actions].set(w3)
    b3p = jnp.zeros((1, n_out_p), jnp.float32).at[:, :n_actions].set(b3)

    # --- Batch tiling: pad B to a multiple of 8, cap tile at tile_b rows. ---
    if B <= tile_b:
        TB = _round_up(B, 8)
        B_pad = TB
    else:
        TB = _round_up(tile_b, 8)
        B_pad = _round_up(B, TB)
    if B_pad != B:
        x = jnp.pad(x, ((0, B_pad - B), (0, 0)))
    grid = (B_pad // TB,)

    # --- dtype strategy: bf16 matmul inputs, f32 accumulation/epilogue. ---
    small_k = n_state <= 16
    if small_k:
        x_in = x.astype(jnp.float32)      # fc1 runs on the VPU in f32
        w1_in = w1.astype(jnp.float32)
    else:
        x_in = x.astype(jnp.bfloat16)     # fc1 runs on the MXU in bf16
        w1_in = w1.astype(jnp.bfloat16)
    w2_in = w2.astype(jnp.bfloat16)
    w3_in = w3p.astype(jnp.bfloat16)

    kernel = make_dqn_kernel(n_state, small_k)

    def resident(shape):
        # Weights / biases: same block for every grid step -> stay VMEM-resident.
        return pl.BlockSpec(shape, lambda i: (0, 0))

    out = pl.pallas_call(
        kernel,
        out_shape=jax.ShapeDtypeStruct((B_pad, n_out_p), jnp.float32),
        grid=grid,
        in_specs=[
            pl.BlockSpec((TB, n_state), lambda i: (i, 0)),   # activation tiles
            resident(w1_in.shape), resident(b1.shape),
            resident(w2_in.shape), resident(b2.shape),
            resident(w3_in.shape), resident(b3p.shape),
        ],
        out_specs=pl.BlockSpec((TB, n_out_p), lambda i: (i, 0)),
        compiler_params=pltpu.CompilerParams(
            dimension_semantics=("parallel",),   # megacore sharding on v7x
        ),
    )(x_in, w1_in, b1, w2_in, b2, w3_in, b3p)

    return out[:B, :n_actions]


def init_params(key, n_state, n_actions, hidden=128):
    """Deterministic init mimicking nn.Linear's U(-1/sqrt(fan_in), 1/sqrt(fan_in))."""
    ks = jax.random.split(key, 6)

    def linear(kw, kb, fan_in, fan_out):
        bound = 1.0 / jnp.sqrt(fan_in)
        w = jax.random.uniform(kw, (fan_in, fan_out), jnp.float32, -bound, bound)
        b = jax.random.uniform(kb, (1, fan_out), jnp.float32, -bound, bound)
        return w, b

    w1, b1 = linear(ks[0], ks[1], n_state, hidden)
    w2, b2 = linear(ks[2], ks[3], hidden, hidden)
    w3, b3 = linear(ks[4], ks[5], hidden, n_actions)
    return (w1, b1, w2, b2, w3, b3)


def _reference(x, params):
    w1, b1, w2, b2, w3, b3 = params
    h = jnp.maximum(x @ w1 + b1, 0.0)
    h = jnp.maximum(h @ w2 + b2, 0.0)
    return h @ w3 + b3


if __name__ == "__main__":
    key = jax.random.PRNGKey(0)
    k_params, k_x1, k_x2 = jax.random.split(key, 3)

    batch, n_state, n_actions = 8, 4, 2   # CartPole-like state/action dims
    params = init_params(k_params, n_state, n_actions)

    # Small case: single grid point.
    x_small = jax.random.normal(k_x1, (batch, n_state), jnp.float32)
    out_small = jax.block_until_ready(dqn_forward(x_small, params))
    ref_small = _reference(x_small, params)
    assert out_small.shape == (batch, n_actions)
    # bf16 matmul inputs -> compare against the f32 reference with a loose tolerance.
    assert jnp.allclose(out_small, ref_small, atol=2e-2, rtol=2e-2)

    # Slightly larger case with a small tile to exercise the pipelined batch grid
    # (grid of 4 tiles, resident weights, batch padding path).
    x_big = jax.random.normal(k_x2, (60, n_state), jnp.float32)
    out_big = jax.block_until_ready(dqn_forward(x_big, params, tile_b=16))
    ref_big = _reference(x_big, params)
    assert out_big.shape == (60, n_actions)
    assert jnp.allclose(out_big, ref_big, atol=2e-2, rtol=2e-2)

    print("KERNEL_OK")
</pallas_src>

<mosaic_0001>
module attributes {stable_mosaic.version = 11 : i64} {
  func.func @dqn_kernel(%arg0: i32, %arg1: memref<8x4xf32, #tpu.memory_space<vmem>>, %arg2: memref<4x128xf32, #tpu.memory_space<vmem>>, %arg3: memref<1x128xf32, #tpu.memory_space<vmem>>, %arg4: memref<128x128xbf16, #tpu.memory_space<vmem>>, %arg5: memref<1x128xf32, #tpu.memory_space<vmem>>, %arg6: memref<128x128xbf16, #tpu.memory_space<vmem>>, %arg7: memref<1x128xf32, #tpu.memory_space<vmem>>, %arg8: memref<8x128xf32, #tpu.memory_space<vmem>>) attributes {dimension_semantics = [#tpu.dimension_semantics<parallel>], iteration_bounds = array<i64: 1>, scalar_prefetch = 0 : i64, scratch_operands = 0 : i64, tpu.core_type = #tpu.core_type<tc>, window_params = [{transform_indices = @transform_0, window_bounds = array<i64: 8, 4>}, {pipeline_mode = #tpu.pipeline_mode<synchronous>, transform_indices = @transform_1, window_bounds = array<i64: 4, 128>}, {pipeline_mode = #tpu.pipeline_mode<synchronous>, transform_indices = @transform_2, window_bounds = array<i64: 1, 128>}, {pipeline_mode = #tpu.pipeline_mode<synchronous>, transform_indices = @transform_3, window_bounds = array<i64: 128, 128>}, {pipeline_mode = #tpu.pipeline_mode<synchronous>, transform_indices = @transform_4, window_bounds = array<i64: 1, 128>}, {pipeline_mode = #tpu.pipeline_mode<synchronous>, transform_indices = @transform_5, window_bounds = array<i64: 128, 128>}, {pipeline_mode = #tpu.pipeline_mode<synchronous>, transform_indices = @transform_6, window_bounds = array<i64: 1, 128>}, {transform_indices = @transform_7, window_bounds = array<i64: 8, 128>}]} {
    %c0 = arith.constant 0 : index
    %c0_0 = arith.constant 0 : index
    %0 = vector.load %arg1[%c0, %c0_0] : memref<8x4xf32, #tpu.memory_space<vmem>>, vector<8x4xf32>
    %c0_1 = arith.constant 0 : index
    %c0_2 = arith.constant 0 : index
    %1 = vector.load %arg2[%c0_1, %c0_2] : memref<4x128xf32, #tpu.memory_space<vmem>>, vector<4x128xf32>
    %c0_3 = arith.constant 0 : index
    %c0_4 = arith.constant 0 : index
    %2 = vector.load %arg3[%c0_3, %c0_4] : memref<1x128xf32, #tpu.memory_space<vmem>>, vector<1x128xf32>
    %3 = vector.extract_strided_slice %0 {offsets = [0, 0], sizes = [8, 1], strides = [1, 1]} : vector<8x4xf32> to vector<8x1xf32>
    %4 = vector.extract_strided_slice %1 {offsets = [0, 0], sizes = [1, 128], strides = [1, 1]} : vector<4x128xf32> to vector<1x128xf32>
    %5 = vector.broadcast %3 : vector<8x1xf32> to vector<8x128xf32>
    %6 = vector.broadcast %4 : vector<1x128xf32> to vector<8x128xf32>
    %7 = arith.mulf %5, %6 : vector<8x128xf32>
    %8 = vector.broadcast %2 : vector<1x128xf32> to vector<8x128xf32>
    %9 = arith.addf %8, %7 : vector<8x128xf32>
    %10 = vector.extract_strided_slice %0 {offsets = [0, 1], sizes = [8, 1], strides = [1, 1]} : vector<8x4xf32> to vector<8x1xf32>
    %11 = vector.extract_strided_slice %1 {offsets = [1, 0], sizes = [1, 128], strides = [1, 1]} : vector<4x128xf32> to vector<1x128xf32>
    %12 = vector.broadcast %10 : vector<8x1xf32> to vector<8x128xf32>
    %13 = vector.broadcast %11 : vector<1x128xf32> to vector<8x128xf32>
    %14 = arith.mulf %12, %13 : vector<8x128xf32>
    %15 = arith.addf %9, %14 : vector<8x128xf32>
    %16 = vector.extract_strided_slice %0 {offsets = [0, 2], sizes = [8, 1], strides = [1, 1]} : vector<8x4xf32> to vector<8x1xf32>
    %17 = vector.extract_strided_slice %1 {offsets = [2, 0], sizes = [1, 128], strides = [1, 1]} : vector<4x128xf32> to vector<1x128xf32>
    %18 = vector.broadcast %16 : vector<8x1xf32> to vector<8x128xf32>
    %19 = vector.broadcast %17 : vector<1x128xf32> to vector<8x128xf32>
    %20 = arith.mulf %18, %19 : vector<8x128xf32>
    %21 = arith.addf %15, %20 : vector<8x128xf32>
    %22 = vector.extract_strided_slice %0 {offsets = [0, 3], sizes = [8, 1], strides = [1, 1]} : vector<8x4xf32> to vector<8x1xf32>
    %23 = vector.extract_strided_slice %1 {offsets = [3, 0], sizes = [1, 128], strides = [1, 1]} : vector<4x128xf32> to vector<1x128xf32>
    %24 = vector.broadcast %22 : vector<8x1xf32> to vector<8x128xf32>
    %25 = vector.broadcast %23 : vector<1x128xf32> to vector<8x128xf32>
    %26 = arith.mulf %24, %25 : vector<8x128xf32>
    %27 = arith.addf %21, %26 : vector<8x128xf32>
    %cst = arith.constant 0.000000e+00 : f32
    %28 = vector.broadcast %cst : f32 to vector<8x128xf32>
    %29 = arith.maximumf %27, %28 : vector<8x128xf32>
    %30 = arith.truncf %29 : vector<8x128xf32> to vector<8x128xbf16>
    %c0_5 = arith.constant 0 : index
    %c0_6 = arith.constant 0 : index
    %31 = vector.load %arg4[%c0_5, %c0_6] : memref<128x128xbf16, #tpu.memory_space<vmem>>, vector<128x128xbf16>
    %cst_7 = arith.constant dense<0.000000e+00> : vector<8x128xf32>
    %32 = tpu.matmul %30, %31, %cst_7 {dimension_numbers = #tpu.dot_dimension_numbers<[1], [0], [0], [1], [0, 0, 1, 1], [], []>} : vector<8x128xbf16>, vector<128x128xbf16>, vector<8x128xf32> -> vector<8x128xf32>
    %c0_8 = arith.constant 0 : index
    %c0_9 = arith.constant 0 : index
    %33 = vector.load %arg5[%c0_8, %c0_9] : memref<1x128xf32, #tpu.memory_space<vmem>>, vector<1x128xf32>
    %34 = vector.broadcast %33 : vector<1x128xf32> to vector<8x128xf32>
    %35 = arith.addf %32, %34 : vector<8x128xf32>
    %cst_10 = arith.constant 0.000000e+00 : f32
    %36 = vector.broadcast %cst_10 : f32 to vector<8x128xf32>
    %37 = arith.maximumf %35, %36 : vector<8x128xf32>
    %38 = arith.truncf %37 : vector<8x128xf32> to vector<8x128xbf16>
    %c0_11 = arith.constant 0 : index
    %c0_12 = arith.constant 0 : index
    %39 = vector.load %arg6[%c0_11, %c0_12] : memref<128x128xbf16, #tpu.memory_space<vmem>>, vector<128x128xbf16>
    %cst_13 = arith.constant dense<0.000000e+00> : vector<8x128xf32>
    %40 = tpu.matmul %38, %39, %cst_13 {dimension_numbers = #tpu.dot_dimension_numbers<[1], [0], [0], [1], [0, 0, 1, 1], [], []>} : vector<8x128xbf16>, vector<128x128xbf16>, vector<8x128xf32> -> vector<8x128xf32>
    %c0_14 = arith.constant 0 : index
    %c0_15 = arith.constant 0 : index
    %41 = vector.load %arg7[%c0_14, %c0_15] : memref<1x128xf32, #tpu.memory_space<vmem>>, vector<1x128xf32>
    %42 = vector.broadcast %41 : vector<1x128xf32> to vector<8x128xf32>
    %43 = arith.addf %40, %42 : vector<8x128xf32>
    %c0_16 = arith.constant 0 : index
    %c0_17 = arith.constant 0 : index
    %44 = vector.load %arg8[%c0_16, %c0_17] : memref<8x128xf32, #tpu.memory_space<vmem>>, vector<8x128xf32>
    tpu.vector_store %arg8[%c0_16, %c0_17], %43 {strides = array<i32>} : memref<8x128xf32, #tpu.memory_space<vmem>>, vector<8x128xf32>,
    return
  }
  func.func @transform_0(%arg0: i32) -> (i32, i32) {
    %c0_i32 = arith.constant 0 : i32
    %c0_i32_0 = arith.constant 0 : i32
    return %arg0, %c0_i32 : i32, i32
  }
  func.func @transform_1(%arg0: i32) -> (i32, i32) {
    %c0_i32 = arith.constant 0 : i32
    %c0_i32_0 = arith.constant 0 : i32
    %c0_i32_1 = arith.constant 0 : i32
    return %c0_i32, %c0_i32_0 : i32, i32
  }
  func.func @transform_2(%arg0: i32) -> (i32, i32) {
    %c0_i32 = arith.constant 0 : i32
    %c0_i32_0 = arith.constant 0 : i32
    %c0_i32_1 = arith.constant 0 : i32
    return %c0_i32, %c0_i32_0 : i32, i32
  }
  func.func @transform_3(%arg0: i32) -> (i32, i32) {
    %c0_i32 = arith.constant 0 : i32
    %c0_i32_0 = arith.constant 0 : i32
    %c0_i32_1 = arith.constant 0 : i32
    return %c0_i32, %c0_i32_0 : i32, i32
  }
  func.func @transform_4(%arg0: i32) -> (i32, i32) {
    %c0_i32 = arith.constant 0 : i32
    %c0_i32_0 = arith.constant 0 : i32
    %c0_i32_1 = arith.constant 0 : i32
    return %c0_i32, %c0_i32_0 : i32, i32
  }
  func.func @transform_5(%arg0: i32) -> (i32, i32) {
    %c0_i32 = arith.constant 0 : i32
    %c0_i32_0 = arith.constant 0 : i32
    %c0_i32_1 = arith.constant 0 : i32
    return %c0_i32, %c0_i32_0 : i32, i32
  }
  func.func @transform_6(%arg0: i32) -> (i32, i32) {
    %c0_i32 = arith.constant 0 : i32
    %c0_i32_0 = arith.constant 0 : i32
    %c0_i32_1 = arith.constant 0 : i32
    return %c0_i32, %c0_i32_0 : i32, i32
  }
  func.func @transform_7(%arg0: i32) -> (i32, i32) {
    %c0_i32 = arith.constant 0 : i32
    %c0_i32_0 = arith.constant 0 : i32
    return %arg0, %c0_i32 : i32, i32
  }
}

</mosaic_0001>

<llo_original>
// kernel: tpu_custom_call.1
$region0: #{tpu_custom_call.1}
  #allocation0 [shape = 'u32[]', space=smem, size = 0x4, offset = 0x4, fixed_abs, tag = 'smem constant byte address 0x4 - core index']
  #allocation1 [shape = 'u32[72,128]{1,0:T(1,128)}', space=vmem, size = 0x9000, scoped, tag = 'internal scratch']
  %s0 = inlined_call_operand.vmem [shape: f32[8,4], index: 0, kind: input, shape index: {}]
  %s1 = inlined_call_operand.vmem [shape: f32[4,128], index: 1, kind: input, shape index: {}]
  %s2 = inlined_call_operand.vmem [shape: f32[1,128], index: 2, kind: input, shape index: {}]
  %s3 = inlined_call_operand.hbm [shape: bf16[128,128], index: 3, kind: input, shape index: {}]
  %s4 = inlined_call_operand.vmem [shape: f32[1,128], index: 4, kind: input, shape index: {}]
  %s5 = inlined_call_operand.hbm [shape: bf16[128,128], index: 5, kind: input, shape index: {}]
  %s6 = inlined_call_operand.vmem [shape: f32[1,128], index: 6, kind: input, shape index: {}]
  %s7 = inlined_call_operand.hbm [shape: f32[8,128], index: 7, kind: output, shape index: {}]
  %s8 = sld [smem:[#allocation0]]
  $region46: #{tpu_custom_call.1} parent=0
    _
  %s10 = ssub.s32 1, %s8
  %s11 = scalar_select 0, %s10, %s8
  $region1: #{tpu_custom_call.1} parent=0
    #allocation2 [shape = 'u8[32768]{0}', space=vmem, size = 0x8000, scoped, tag = 'input window, operand 3, single buffered']
    #allocation3 [shape = 's32[1]{0}', space=sflag, size = 0x4, scoped, tag = 'scoped memory for tpu_custom_call.1']
    #allocation4 [shape = 's32[1]{0}', space=sflag, size = 0x4, scoped, tag = 'scoped memory for tpu_custom_call.1']
    #allocation5 [shape = 'u8[32768]{0}', space=vmem, size = 0x8000, scoped, tag = 'input window, operand 5, single buffered']
    #allocation6 [shape = 's32[1]{0}', space=sflag, size = 0x4, scoped, tag = 'scoped memory for tpu_custom_call.1']
    #allocation7 [shape = 'u8[4096]{0}', space=vmem, size = 0x1000, scoped, tag = 'output window, operand 0, single buffered']
    %12 = vsyncpa [#allocation3], 0
    %13 = vsyncpa [#allocation6], 0
    %14 = vsyncpa [#allocation4], 0
    // Predicated region
    $region2: #{tpu_custom_call.1} parent=1 // pred_check
      _
    $region3: #{tpu_custom_call.1} parent=1 // pred_check_branch
      %16 = sbr.rel (0) target = $region5
    $region4: #{tpu_custom_call.1} parent=1 // pred_region
      _
    $region5: #{tpu_custom_call.1} parent=1 // pred_fallthru
      _
    // Predicated region
    $region6: #{tpu_custom_call.1} parent=1 // pred_check
      _
    $region7: #{tpu_custom_call.1} parent=1 // pred_check_branch
      %18 = sbr.rel (0) target = $region9
    $region8: #{tpu_custom_call.1} parent=1 // pred_region
      _
    $region9: #{tpu_custom_call.1} parent=1 // pred_fallthru
      _
    // Predicated region
    $region10: #{tpu_custom_call.1} parent=1 // pred_check
      _
    $region11: #{tpu_custom_call.1} parent=1 // pred_check_branch
      %20 = sbr.rel (0) target = $region13
    $region12: #{tpu_custom_call.1} parent=1 // pred_region
      _
    $region13: #{tpu_custom_call.1} parent=1 // pred_fallthru
      _
    // Predicated region
    $region14: #{tpu_custom_call.1} parent=1 // pred_check
      _
    $region15: #{tpu_custom_call.1} parent=1 // pred_check_branch
      %22 = sbr.rel (0) target = $region17
    $region16: #{tpu_custom_call.1} parent=1 // pred_region
      %24 = vsyncadd [#allocation3], 0
      %s25 = sshll.u32 %s3, 4
      %s26 = int_to_ptr.hbm [resolvable:$true] %s25
      %s27 = sshll.u32 [#allocation2], 4
      %s28 = int_to_ptr.vmem [resolvable:$true] %s27
      %33 = dma.hbm_to_vmem [thread:$0]  %s26, 1024, %s28, [#allocation3], 64, 64, 4
    $region17: #{tpu_custom_call.1} parent=1 // pred_fallthru
      _
    // Predicated region
    $region18: #{tpu_custom_call.1} parent=1 // pred_check
      _
    $region19: #{tpu_custom_call.1} parent=1 // pred_check_branch
      %35 = sbr.rel (0) target = $region21
    $region20: #{tpu_custom_call.1} parent=1 // pred_region
      _
    $region21: #{tpu_custom_call.1} parent=1 // pred_fallthru
      _
    // Predicated region
    $region22: #{tpu_custom_call.1} parent=1 // pred_check
      _
    $region23: #{tpu_custom_call.1} parent=1 // pred_check_branch
      %37 = sbr.rel (0) target = $region25
    $region24: #{tpu_custom_call.1} parent=1 // pred_region
      %39 = vsyncadd [#allocation6], 0
      %s40 = sshll.u32 %s5, 4
      %s41 = int_to_ptr.hbm [resolvable:$true] %s40
      %s42 = sshll.u32 [#allocation5], 4
      %s43 = int_to_ptr.vmem [resolvable:$true] %s42
      %48 = dma.hbm_to_vmem [thread:$0]  %s41, 1024, %s43, [#allocation6], 64, 64, 4
    $region25: #{tpu_custom_call.1} parent=1 // pred_fallthru
      _
    // Predicated region
    $region26: #{tpu_custom_call.1} parent=1 // pred_check
      _
    $region27: #{tpu_custom_call.1} parent=1 // pred_check_branch
      %50 = sbr.rel (0) target = $region29
    $region28: #{tpu_custom_call.1} parent=1 // pred_region
      _
    $region29: #{tpu_custom_call.1} parent=1 // pred_fallthru
      _
    // Predicated region
    $region30: #{tpu_custom_call.1} parent=1 // pred_check
      _
    $region31: #{tpu_custom_call.1} parent=1 // pred_check_branch
      %52 = sbr.rel (0) target = $region33
    $region32: #{tpu_custom_call.1} parent=1 // pred_region
      %54 = dma.done [#allocation3], 1024
    $region33: #{tpu_custom_call.1} parent=1 // pred_fallthru
      _
    // Predicated region
    $region34: #{tpu_custom_call.1} parent=1 // pred_check
      _
    $region35: #{tpu_custom_call.1} parent=1 // pred_check_branch
      %56 = sbr.rel (0) target = $region37
    $region36: #{tpu_custom_call.1} parent=1 // pred_region
      %58 = dma.done [#allocation6], 1024
    $region37: #{tpu_custom_call.1} parent=1 // pred_fallthru
      _
    %v59 = vld [vmem:[%s0] sm:$0xff]
    %v60 = vld [vmem:[%s1] sm:$0xf]
    %v61 = vld [vmem:[%s2] sm:$0x1]
    %63 = vset.pattern.permute.xlu0 0
    %64 = vperm.xlu0 %63, %v59
    %v65 = vpop.permute.xlu0 %64
    %v67 = vperm.slane %v60, 0
    %v68 = vmul.f32 %v65, %v67
    %v70 = vperm.slane %v61, 0
    %v72 = vadd.f32 %v70, %v68
    %73 = vset.pattern.permute.xlu0 1
    %74 = vperm.xlu0 %73, %v59
    %v75 = vpop.permute.xlu0 %74
    %v77 = vperm.slane %v60, 1
    %v78 = vmul.f32 %v75, %v77
    %v79 = vadd.f32 %v72, %v78
    %80 = vset.pattern.permute.xlu0 2
    %81 = vperm.xlu0 %80, %v59
    %v82 = vpop.permute.xlu0 %81
    %v84 = vperm.slane %v60, 2
    %v85 = vmul.f32 %v82, %v84
    %v86 = vadd.f32 %v79, %v85
    %87 = vset.pattern.permute.xlu0 3
    %88 = vperm.xlu0 %87, %v59
    %v89 = vpop.permute.xlu0 %88
    %v91 = vperm.slane %v60, 3
    %v92 = vmul.f32 %v89, %v91
    %v93 = vadd.f32 %v86, %v92
    %v94 = vmax.f32 %v93, 0.0
    %v95 = vpack.c.bf16 %v94, %v94
    %v96 = vld [vmem:[#allocation2] sm:$0xf]
    %v97 = vld [vmem:[#allocation2 + $0x4] sm:$0xf]
    %v98 = vld [vmem:[#allocation2 + $0x8] sm:$0xf]
    %v99 = vld [vmem:[#allocation2 + $0xc] sm:$0xf]
    %v100 = vld [vmem:[#allocation2 + $0x10] sm:$0xf]
    %v101 = vld [vmem:[#allocation2 + $0x14] sm:$0xf]
    %v102 = vld [vmem:[#allocation2 + $0x18] sm:$0xf]
    %v103 = vld [vmem:[#allocation2 + $0x1c] sm:$0xf]
    %v104 = vld [vmem:[#allocation2 + $0x20] sm:$0xf]
    %v105 = vld [vmem:[#allocation2 + $0x24] sm:$0xf]
    %v106 = vld [vmem:[#allocation2 + $0x28] sm:$0xf]
    %v107 = vld [vmem:[#allocation2 + $0x2c] sm:$0xf]
    %v108 = vld [vmem:[#allocation2 + $0x30] sm:$0xf]
    %v109 = vld [vmem:[#allocation2 + $0x34] sm:$0xf]
    %v110 = vld [vmem:[#allocation2 + $0x38] sm:$0xf]
    %v111 = vld [vmem:[#allocation2 + $0x3c] sm:$0xf]
    %v112 = vld [vmem:[%s4] sm:$0x1]
    %v114 = vperm.slane %v112, 0
    %v132 = vunpack.c.l.b16 %v96
    %v133 = vunpack.c.l.b16 %v97
    %v134 = vunpack.c.l.b16 %v98
    %v135 = vunpack.c.l.b16 %v99
    %v136 = vunpack.c.l.b16 %v100
    %v137 = vunpack.c.l.b16 %v101
    %v138 = vunpack.c.l.b16 %v102
    %v139 = vunpack.c.l.b16 %v103
    %v140 = vunpack.c.l.b16 %v104
    %v141 = vunpack.c.l.b16 %v105
    %v142 = vunpack.c.l.b16 %v106
    %v143 = vunpack.c.l.b16 %v107
    %v144 = vunpack.c.l.b16 %v108
    %v145 = vunpack.c.l.b16 %v109
    %v146 = vunpack.c.l.b16 %v110
    %v147 = vunpack.c.l.b16 %v111
    %v148 = vpack.c.b16 %v133, %v132
    %v149 = vpack.c.b16 %v135, %v134
    %v150 = vpack.c.b16 %v137, %v136
    %v151 = vpack.c.b16 %v139, %v138
    %v152 = vpack.c.b16 %v141, %v140
    %v153 = vpack.c.b16 %v143, %v142
    %v154 = vpack.c.b16 %v145, %v144
    %v155 = vpack.c.b16 %v147, %v146
    %164 = vmatpush.bf16.msra.mxu0 %v155
    %165 = vmatpush.bf16.msra.mxu0 %v154
    %166 = vmatpush.bf16.msra.mxu0 %v153
    %167 = vmatpush.bf16.msra.mxu0 %v152
    %168 = vmatpush.bf16.msra.mxu0 %v151
    %169 = vmatpush.bf16.msra.mxu0 %v150
    %170 = vmatpush.bf16.msra.mxu0 %v149
    %171 = vmatpush.bf16.msra.mxu0 %v148
    %172 = vmatmul.bf16.gmra.mxu0 %v95
    %v173 = vpop.f32.mrf.mxu0
    %v174 = vadd.f32 %v114, %v173
    %v175 = vpop.f32.mrf.mxu0
    %176 = vdwg.mxu0
    %v177 = vmax.f32 %v174, 0.0
    %v178 = vpack.c.bf16 %v177, %v177
    %v179 = vld [vmem:[#allocation5] sm:$0xf]
    %v180 = vld [vmem:[#allocation5 + $0x4] sm:$0xf]
    %v181 = vld [vmem:[#allocation5 + $0x8] sm:$0xf]
    %v182 = vld [vmem:[#allocation5 + $0xc] sm:$0xf]
    %v183 = vld [vmem:[#allocation5 + $0x10] sm:$0xf]
    %v184 = vld [vmem:[#allocation5 + $0x14] sm:$0xf]
    %v185 = vld [vmem:[#allocation5 + $0x18] sm:$0xf]
    %v186 = vld [vmem:[#allocation5 + $0x1c] sm:$0xf]
    %v187 = vld [vmem:[#allocation5 + $0x20] sm:$0xf]
    %v188 = vld [vmem:[#allocation5 + $0x24] sm:$0xf]
    %v189 = vld [vmem:[#allocation5 + $0x28] sm:$0xf]
    %v190 = vld [vmem:[#allocation5 + $0x2c] sm:$0xf]
    %v191 = vld [vmem:[#allocation5 + $0x30] sm:$0xf]
    %v192 = vld [vmem:[#allocation5 + $0x34] sm:$0xf]
    %v193 = vld [vmem:[#allocation5 + $0x38] sm:$0xf]
    %v194 = vld [vmem:[#allocation5 + $0x3c] sm:$0xf]
    %v195 = vld [vmem:[%s6] sm:$0x1]
    %v197 = vperm.slane %v195, 0
    %v215 = vunpack.c.l.b16 %v179
    %v216 = vunpack.c.l.b16 %v180
    %v217 = vunpack.c.l.b16 %v181
    %v218 = vunpack.c.l.b16 %v182
    %v219 = vunpack.c.l.b16 %v183
    %v220 = vunpack.c.l.b16 %v184
    %v221 = vunpack.c.l.b16 %v185
    %v222 = vunpack.c.l.b16 %v186
    %v223 = vunpack.c.l.b16 %v187
    %v224 = vunpack.c.l.b16 %v188
    %v225 = vunpack.c.l.b16 %v189
    %v226 = vunpack.c.l.b16 %v190
    %v227 = vunpack.c.l.b16 %v191
    %v228 = vunpack.c.l.b16 %v192
    %v229 = vunpack.c.l.b16 %v193
    %v230 = vunpack.c.l.b16 %v194
    %v231 = vpack.c.b16 %v216, %v215
    %v232 = vpack.c.b16 %v218, %v217
    %v233 = vpack.c.b16 %v220, %v219
    %v234 = vpack.c.b16 %v222, %v221
    %v235 = vpack.c.b16 %v224, %v223
    %v236 = vpack.c.b16 %v226, %v225
    %v237 = vpack.c.b16 %v228, %v227
    %v238 = vpack.c.b16 %v230, %v229
    %247 = vmatpush.bf16.msra.mxu0 %v238
    %248 = vmatpush.bf16.msra.mxu0 %v237
    %249 = vmatpush.bf16.msra.mxu0 %v236
    %250 = vmatpush.bf16.msra.mxu0 %v235
    %251 = vmatpush.bf16.msra.mxu0 %v234
    %252 = vmatpush.bf16.msra.mxu0 %v233
    %253 = vmatpush.bf16.msra.mxu0 %v232
    %254 = vmatpush.bf16.msra.mxu0 %v231
    %255 = vmatmul.bf16.gmra.mxu0 %v178
    %v256 = vpop.f32.mrf.mxu0
    %v257 = vadd.f32 %v197, %v256
    %v258 = vpop.f32.mrf.mxu0
    %259 = vdwg.mxu0
    %260 = vst [vmem:[#allocation7] sm:$0xff] %v257
    // Predicated region
    $region38: #{tpu_custom_call.1} parent=1 // pred_check
      _
    $region39: #{tpu_custom_call.1} parent=1 // pred_check_branch
      %262 = sbr.rel (0) target = $region41
    $region40: #{tpu_custom_call.1} parent=1 // pred_region
      %264 = vsyncadd [#allocation4], 0
      %s266 = sshll.u32 [#allocation7], 4
      %s267 = int_to_ptr.vmem [resolvable:$true] %s266
      %s268 = sshll.u32 %s7, 4
      %s269 = int_to_ptr.hbm [resolvable:$true] %s268
      %271 = dma.vmem_to_hbm [thread:$0]  %s267, 128, %s269, [#allocation4]
    $region41: #{tpu_custom_call.1} parent=1 // pred_fallthru
      _
    // Predicated region
    $region42: #{tpu_custom_call.1} parent=1 // pred_check
      _
    $region43: #{tpu_custom_call.1} parent=1 // pred_check_branch
      %273 = sbr.rel (0) target = $region45
    $region44: #{tpu_custom_call.1} parent=1 // pred_region
      %275 = dma.done [#allocation4], 128
    $region45: #{tpu_custom_call.1} parent=1 // pred_fallthru
      _
    %276 = vsyncpa [#allocation3], 1
    %277 = vsyncpa [#allocation6], 1
    %278 = vsyncpa [#allocation4], 1

</llo_original>
